<compile_context>
chip_gen: v6e
topology: v6e:2x2x1
jax: 0.10.0
libtpu: 0.0.40
codegen_flags: <defaults>
</compile_context>

<pallas_src>
import functools

import jax
import jax.numpy as jnp
from jax.experimental import pallas as pl
from jax.experimental.pallas import tpu as pltpu


def _ls_token_loss_kernel(x_ref, t_ref, loss_ref, *, epsilon, vocab, seq_len,
                          tile_t):
    """Per-token smoothed-CE loss for one (1, K, tile_T) logits block."""
    x = x_ref[0].astype(jnp.float32)              # (K, tile_T): K sublanes, T lanes
    t = t_ref[0]                                  # (1, tile_T) int32 labels

    # log-sum-exp along the vocab (sublane) axis, per lane/token.
    m = jnp.max(x, axis=0, keepdims=True)                          # (1, tile_T)
    lse = jnp.log(jnp.sum(jnp.exp(x - m), axis=0, keepdims=True)) + m
    sum_x = jnp.sum(x, axis=0, keepdims=True)                      # (1, tile_T)

    # x[target] per token via masked select + sublane reduce.
    kiota = jax.lax.broadcasted_iota(jnp.int32, x.shape, 0)        # (K, tile_T)
    x_t = jnp.sum(jnp.where(kiota == t, x, 0.0), axis=0, keepdims=True)

    # loss = lse - (eps/K)*sum_k(x) - (1-eps)*x[target]   (tprob sums to 1)
    loss = (lse
            - jnp.float32(epsilon / vocab) * sum_x
            - jnp.float32(1.0 - epsilon) * x_t)                    # (1, tile_T)

    # Zero the ragged T tail of the last tile (overhanging lanes read garbage).
    col = (jax.lax.broadcasted_iota(jnp.int32, loss.shape, 1)
           + pl.program_id(1) * tile_t)
    loss_ref[0] = jnp.where(col < seq_len, loss, 0.0)


def _vmem_capacity_bytes():
    try:
        return int(pltpu.get_tpu_info().vmem_capacity_bytes)
    except Exception:
        return 64 << 20   # conservative (v7x has 64 MiB per TC)


def _pick_tile_t(T, K, itemsize, vmem_bytes):
    """Largest T tile (lanes) whose double-buffered logits block + a couple of
    f32 full-tile temporaries stay within ~60% of physical VMEM."""
    per_lane = K * (2 * itemsize + 2 * 4)     # 2 input buffers + ~2 f32 temps
    max_lanes = max(128, (int(0.6 * vmem_bytes) // per_lane) // 128 * 128)
    if T <= 128 or max_lanes >= T:
        return T                               # whole axis is always legal
    return min(max_lanes, 2048)


def label_smoothing_loss(logits, target, *, ignore_index, epsilon=0.1,
                         seq_avg=False):
    """logits: (B, K, T) float, target: (B, T) int.  Returns scalar f32 loss.

    Note: if every target equals ignore_index the final divide is NaN, which
    matches the PyTorch reference behaviour.
    """
    B, K, T = logits.shape
    assert target.shape == (B, T)

    vmem_bytes = _vmem_capacity_bytes()
    tile_t = _pick_tile_t(T, K, jnp.dtype(logits.dtype).itemsize, vmem_bytes)
    grid = (B, pl.cdiv(T, tile_t))

    # Targets as a lane-dense (B, 1, T) int32 row (tiny; reshape is free).
    t3 = target.reshape(B, 1, T).astype(jnp.int32)

    kernel = functools.partial(_ls_token_loss_kernel, epsilon=float(epsilon),
                               vocab=K, seq_len=T, tile_t=tile_t)

    # TODO(synk): very large vocab (K * tile_t * 4 >> VMEM) would need a
    # K-tiled online-softmax inner loop; this version keeps full K per block.
    per_tok = pl.pallas_call(
        kernel,
        out_shape=jax.ShapeDtypeStruct((B, 1, T), jnp.float32),
        grid_spec=pltpu.PrefetchScalarGridSpec(
            num_scalar_prefetch=0,
            grid=grid,
            in_specs=[
                pl.BlockSpec((1, K, tile_t), lambda b, j: (b, 0, j)),
                pl.BlockSpec((1, 1, tile_t), lambda b, j: (b, 0, j)),
            ],
            out_specs=pl.BlockSpec((1, 1, tile_t), lambda b, j: (b, 0, j)),
        ),
        compiler_params=pltpu.CompilerParams(
            dimension_semantics=("parallel", "parallel"),
            vmem_limit_bytes=int(0.85 * vmem_bytes)),
    )(logits, t3)

    per_tok = per_tok.reshape(B, T)
    mask = (target != ignore_index).astype(jnp.float32)
    masked = per_tok * mask
    if seq_avg:
        return (masked.sum(axis=1) / mask.sum(axis=1)).mean()
    return masked.sum() / mask.sum()


def _reference(logits, target, *, ignore_index, epsilon=0.1, seq_avg=False):
    # pure-JAX reference mirroring the PyTorch forward
    x = jnp.transpose(logits, (0, 2, 1))                # (B, T, K)
    logp = jax.nn.log_softmax(x.astype(jnp.float32), axis=2)
    K = x.shape[2]
    tprob = jnp.full_like(logp, epsilon / K)
    onehot = jax.nn.one_hot(target, K, dtype=bool)
    tprob = jnp.where(onehot, 1.0 - epsilon + epsilon / K, tprob)
    loss = -(tprob * logp).sum(2)
    mask = (target != ignore_index).astype(jnp.float32)
    if seq_avg:
        return ((loss * mask).sum(1) / mask.sum(1)).mean()
    return (loss * mask).sum() / mask.sum()


if __name__ == "__main__":
    key = jax.random.PRNGKey(0)
    B, K, T = 2, 32, 8          # batch, vocab, sequence
    ignore_index = 0
    k1, k2 = jax.random.split(key)
    logits = jax.random.normal(k1, (B, K, T), dtype=jnp.float32)
    target = jax.random.randint(k2, (B, T), 0, K, dtype=jnp.int32)

    out = label_smoothing_loss(logits, target, ignore_index=ignore_index,
                               epsilon=0.1)
    out = jax.block_until_ready(out)
    ref = _reference(logits, target, ignore_index=ignore_index, epsilon=0.1)
    assert jnp.allclose(out, ref, rtol=1e-5, atol=1e-5), (out, ref)

    out_sa = label_smoothing_loss(logits, target, ignore_index=ignore_index,
                                  epsilon=0.1, seq_avg=True)
    out_sa = jax.block_until_ready(out_sa)
    ref_sa = _reference(logits, target, ignore_index=ignore_index,
                        epsilon=0.1, seq_avg=True)
    assert jnp.allclose(out_sa, ref_sa, rtol=1e-5, atol=1e-5), (out_sa, ref_sa)

    print("KERNEL_OK")
</pallas_src>

<mosaic_0001>
module attributes {stable_mosaic.version = 11 : i64} {
  func.func @_ls_token_loss_kernel(%arg0: i32, %arg1: i32, %arg2: memref<1x32x8xf32, #tpu.memory_space<vmem>>, %arg3: memref<1x1x8xi32, #tpu.memory_space<vmem>>, %arg4: memref<1x1x8xf32, #tpu.memory_space<vmem>>) attributes {dimension_semantics = [#tpu.dimension_semantics<parallel>, #tpu.dimension_semantics<parallel>], iteration_bounds = array<i64: 2, 1>, scalar_prefetch = 0 : i64, scratch_operands = 0 : i64, tpu.core_type = #tpu.core_type<tc>, window_params = [{transform_indices = @transform_0, window_bounds = array<i64: 1, 32, 8>}, {transform_indices = @transform_1, window_bounds = array<i64: 1, 1, 8>}, {transform_indices = @transform_2, window_bounds = array<i64: 1, 1, 8>}]} {
    %c0 = arith.constant 0 : index
    %c0_0 = arith.constant 0 : index
    %c0_1 = arith.constant 0 : index
    %0 = vector.load %arg2[%c0, %c0_0, %c0_1] : memref<1x32x8xf32, #tpu.memory_space<vmem>>, vector<1x32x8xf32>
    %1 = vector.shape_cast %0 : vector<1x32x8xf32> to vector<32x8xf32>
    %c0_2 = arith.constant 0 : index
    %c0_3 = arith.constant 0 : index
    %c0_4 = arith.constant 0 : index
    %2 = vector.load %arg3[%c0_2, %c0_3, %c0_4] : memref<1x1x8xi32, #tpu.memory_space<vmem>>, vector<1x1x8xi32>
    %3 = vector.shape_cast %2 : vector<1x1x8xi32> to vector<1x8xi32>
    %cst = arith.constant dense<0xFF800000> : vector<8xf32>
    %4 = vector.multi_reduction <maximumf>, %1, %cst [0] : vector<32x8xf32> to vector<8xf32>
    %5 = vector.shape_cast %4 : vector<8xf32> to vector<1x8xf32>
    %6 = vector.broadcast %5 : vector<1x8xf32> to vector<32x8xf32>
    %7 = arith.subf %1, %6 : vector<32x8xf32>
    %8 = math.exp %7 : vector<32x8xf32>
    %cst_5 = arith.constant dense<0.000000e+00> : vector<8xf32>
    %9 = vector.multi_reduction <add>, %8, %cst_5 [0] : vector<32x8xf32> to vector<8xf32>
    %10 = vector.shape_cast %9 : vector<8xf32> to vector<1x8xf32>
    %11 = math.log %10 : vector<1x8xf32>
    %12 = arith.addf %11, %5 : vector<1x8xf32>
    %cst_6 = arith.constant dense<0.000000e+00> : vector<8xf32>
    %13 = vector.multi_reduction <add>, %1, %cst_6 [0] : vector<32x8xf32> to vector<8xf32>
    %14 = vector.shape_cast %13 : vector<8xf32> to vector<1x8xf32>
    %15 = tpu.iota {dimensions = array<i32: 0>} : vector<32x8xi32>
    %16 = vector.broadcast %3 : vector<1x8xi32> to vector<32x8xi32>
    %17 = arith.cmpi eq, %15, %16 : vector<32x8xi32>
    %cst_7 = arith.constant 0.000000e+00 : f32
    %18 = vector.broadcast %cst_7 : f32 to vector<32x8xf32>
    %19 = arith.select %17, %1, %18 : vector<32x8xi1>, vector<32x8xf32>
    %cst_8 = arith.constant dense<0.000000e+00> : vector<8xf32>
    %20 = vector.multi_reduction <add>, %19, %cst_8 [0] : vector<32x8xf32> to vector<8xf32>
    %21 = vector.shape_cast %20 : vector<8xf32> to vector<1x8xf32>
    %cst_9 = arith.constant 3.125000e-03 : f32
    %22 = vector.broadcast %cst_9 : f32 to vector<1x8xf32>
    %23 = arith.mulf %22, %14 : vector<1x8xf32>
    %24 = arith.subf %12, %23 : vector<1x8xf32>
    %cst_10 = arith.constant 0.899999976 : f32
    %25 = vector.broadcast %cst_10 : f32 to vector<1x8xf32>
    %26 = arith.mulf %25, %21 : vector<1x8xf32>
    %27 = arith.subf %24, %26 : vector<1x8xf32>
    %28 = tpu.iota {dimensions = array<i32: 1>} : vector<1x8xi32>
    %c8_i32 = arith.constant 8 : i32
    %29 = arith.muli %arg1, %c8_i32 : i32
    %30 = vector.broadcast %29 : i32 to vector<1x8xi32>
    %31 = arith.addi %28, %30 : vector<1x8xi32>
    %c8_i32_11 = arith.constant 8 : i32
    %32 = vector.broadcast %c8_i32_11 : i32 to vector<1x8xi32>
    %33 = arith.cmpi slt, %31, %32 : vector<1x8xi32>
    %cst_12 = arith.constant 0.000000e+00 : f32
    %34 = vector.broadcast %cst_12 : f32 to vector<1x8xf32>
    %35 = arith.select %33, %27, %34 : vector<1x8xi1>, vector<1x8xf32>
    %c0_13 = arith.constant 0 : index
    %c0_14 = arith.constant 0 : index
    %c0_15 = arith.constant 0 : index
    %36 = vector.load %arg4[%c0_13, %c0_14, %c0_15] : memref<1x1x8xf32, #tpu.memory_space<vmem>>, vector<1x1x8xf32>
    %37 = vector.shape_cast %36 : vector<1x1x8xf32> to vector<1x8xf32>
    %38 = vector.shape_cast %35 : vector<1x8xf32> to vector<1x1x8xf32>
    tpu.vector_store %arg4[%c0_13, %c0_14, %c0_15], %38 {strides = array<i32>} : memref<1x1x8xf32, #tpu.memory_space<vmem>>, vector<1x1x8xf32>,
    return
  }
  func.func @transform_0(%arg0: i32, %arg1: i32) -> (i32, i32, i32) {
    %c0_i32 = arith.constant 0 : i32
    %c0_i32_0 = arith.constant 0 : i32
    return %arg0, %c0_i32, %arg1 : i32, i32, i32
  }
  func.func @transform_1(%arg0: i32, %arg1: i32) -> (i32, i32, i32) {
    %c0_i32 = arith.constant 0 : i32
    %c0_i32_0 = arith.constant 0 : i32
    return %arg0, %c0_i32, %arg1 : i32, i32, i32
  }
  func.func @transform_2(%arg0: i32, %arg1: i32) -> (i32, i32, i32) {
    %c0_i32 = arith.constant 0 : i32
    %c0_i32_0 = arith.constant 0 : i32
    return %arg0, %c0_i32, %arg1 : i32, i32, i32
  }
}

</mosaic_0001>

<llo_original>
// kernel: tpu_custom_call.1
$region0: #{tpu_custom_call.1}
  #allocation0 [shape = 'u32[]', space=smem, size = 0x4, offset = 0x4, fixed_abs, tag = 'smem constant byte address 0x4 - core index']
  #allocation1 [shape = 'u32[144,128]{1,0:T(1,128)}', space=vmem, size = 0x12000, scoped, tag = 'internal scratch']
  %s0 = inlined_call_operand.vmem [shape: f32[2,32,8], index: 0, kind: input, shape index: {}]
  %s1 = inlined_call_operand.vmem [shape: s32[2,1,8], index: 1, kind: input, shape index: {}]
  %s2 = inlined_call_operand.hbm [shape: f32[2,1,8], index: 2, kind: output, shape index: {}]
  %s3 = sld [smem:[#allocation0]]
  $region41: #{tpu_custom_call.1} parent=0
    _
  %s5 = ssub.s32 1, %s3
  %s6 = scalar_select 0, %s5, %s3
  $region1: #{tpu_custom_call.1} parent=0
    #allocation2 [shape = 'u8[1024]{0}', space=vmem, size = 0x400, scoped, tag = 'output window, operand 0']
    #allocation3 [shape = 's32[2]{0}', space=sflag, size = 0x8, scoped, tag = 'scoped memory for tpu_custom_call.1']
    %7 = vsyncpa [#allocation3], 0
    %s8 = scalar_lea.sflag [#allocation3], 1
    %9 = vsyncpa %s8, 0
    loop: start=0, step=1, limit=4
    $region2: #{tpu_custom_call.1} parent=1 // loop_pre_header
      _
    $region3: #{tpu_custom_call.1} parent=1 // loop_header
      %s11 = sphi 0, %s15
      %p12 = scmp.ge.s32.totalorder %s11, 4
      %s18 = sphi 0, %s30
      %s19 = sphi 0, %s26
      %s20 = sphi 0, %s18
      %s21 = sphi 0, %s19
      %s22 = sphi 0, %s20
      %s23 = sphi 0, %s21
      %s35 = sphi 0, %s37
      %s38 = sphi 0, %s35
      %s39 = sphi 0, %s38
      %s55 = sphi 0, %s39
      %s63 = sphi 0, %s65
      %s66 = sphi 0, %s63
      %s67 = sphi 0, %s66
      %s83 = sphi 0, %s67
      %s91 = sphi 0, %s93
      %s94 = sphi 0, %s91
      %s95 = sphi 0, %s94
      %s111 = sphi 0, %s95
    $region4: #{tpu_custom_call.1} parent=1 // loop_header_branch
      %14 = sbr.rel (%p12) target = $region8
    $region5: #{tpu_custom_call.1} parent=1 // loop_body
      %s16 = ssub.s32 %s11, 1
      %s17 = ssub.s32 %s11, 2
      %s24 = sadd.s32 1, %s19
      %p25 = scmp.ge.s32.totalorder %s24, 1
      %s26 = scalar_select %p25, 0, %s24
      %s27 = sadd.s32 1, %s18
      %s28 = scalar_select %p25, %s27, %s18
      %p29 = scmp.ge.s32.totalorder %s28, 2
      %s30 = scalar_select %p29, 0, %s28
      %s31 = ssub.s32 %s18, %s30
      %s32 = ssub.s32 %s19, %s26
      %s33 = sor.u32 %s31, %s32
      %p34 = scmp.eq.s32.totalorder %s33, 0
      %s36 = sadd.s32 %s35, 1
      %s37 = scalar_select %p34, %s35, %s36
      %p40 = pneg %p34
      %p41 = scmp.eq.s32.totalorder %s11, 1
      %p42 = por %p40, %p41
      %p43 = scmp.ne.s32.totalorder %s35, %s38
      %p44 = scmp.eq.s32.totalorder %s11, 0
      %p45 = por %p43, %p44
      %p46 = scmp.ne.s32.totalorder %s35, %s38
      %p47 = scmp.eq.s32.totalorder %s16, 1
      %p48 = por %p46, %p47
      %p49 = scmp.ne.s32.totalorder %s38, %s39
      %p50 = scmp.eq.s32.totalorder %s16, 0
      %p51 = por %p49, %p50
      %p52 = scmp.ne.s32.totalorder %s38, %s39
      %p53 = scmp.eq.s32.totalorder %s17, 1
      %p54 = por %p52, %p53
      %p56 = scmp.ne.s32.totalorder %s39, %s55
      %p57 = scmp.eq.s32.totalorder %s17, 0
      %p58 = por %p56, %p57
      %s59 = ssub.s32 %s18, %s30
      %s60 = ssub.s32 %s19, %s26
      %s61 = sor.u32 %s59, %s60
      %p62 = scmp.eq.s32.totalorder %s61, 0
      %s64 = sadd.s32 %s63, 1
      %s65 = scalar_select %p62, %s63, %s64
      %p68 = pneg %p62
      %p69 = scmp.eq.s32.totalorder %s11, 1
      %p70 = por %p68, %p69
      %p71 = scmp.ne.s32.totalorder %s63, %s66
      %p72 = scmp.eq.s32.totalorder %s11, 0
      %p73 = por %p71, %p72
      %p74 = scmp.ne.s32.totalorder %s63, %s66
      %p75 = scmp.eq.s32.totalorder %s16, 1
      %p76 = por %p74, %p75
      %p77 = scmp.ne.s32.totalorder %s66, %s67
      %p78 = scmp.eq.s32.totalorder %s16, 0
      %p79 = por %p77, %p78
      %p80 = scmp.ne.s32.totalorder %s66, %s67
      %p81 = scmp.eq.s32.totalorder %s17, 1
      %p82 = por %p80, %p81
      %p84 = scmp.ne.s32.totalorder %s67, %s83
      %p85 = scmp.eq.s32.totalorder %s17, 0
      %p86 = por %p84, %p85
      %s87 = ssub.s32 %s18, %s30
      %s88 = ssub.s32 %s19, %s26
      %s89 = sor.u32 %s87, %s88
      %p90 = scmp.eq.s32.totalorder %s89, 0
      %s92 = sadd.s32 %s91, 1
      %s93 = scalar_select %p90, %s91, %s92
      %p96 = pneg %p90
      %p97 = scmp.eq.s32.totalorder %s11, 1
      %p98 = por %p96, %p97
      %p99 = scmp.ne.s32.totalorder %s91, %s94
      %p100 = scmp.eq.s32.totalorder %s11, 0
      %p101 = por %p99, %p100
      %p102 = scmp.ne.s32.totalorder %s91, %s94
      %p103 = scmp.eq.s32.totalorder %s16, 1
      %p104 = por %p102, %p103
      %p105 = scmp.ne.s32.totalorder %s94, %s95
      %p106 = scmp.eq.s32.totalorder %s16, 0
      %p107 = por %p105, %p106
      %p108 = scmp.ne.s32.totalorder %s94, %s95
      %p109 = scmp.eq.s32.totalorder %s17, 1
      %p110 = por %p108, %p109
      %p112 = scmp.ne.s32.totalorder %s95, %s111
      %p113 = scmp.eq.s32.totalorder %s17, 0
      %p114 = por %p112, %p113
      %p115 = scmp.le.s32.totalorder 1, %s11
      %p116 = scmp.lt.s32.totalorder %s11, 3
      %p117 = pnand %p115, %p116
      %p118 = pneg %p117
      // Predicated region
      $region9: #{tpu_custom_call.1} parent=5 // pred_check
        _
      $region10: #{tpu_custom_call.1} parent=5 // pred_check_branch
        %120 = sbr.rel (%p117) target = $region12
      $region11: #{tpu_custom_call.1} parent=5 // pred_region
        %s121 = ssub.s32 %s11, 1
      $region12: #{tpu_custom_call.1} parent=5 // pred_fallthru
        _
      %p122 = scmp.lt.s32.totalorder %s11, 2
      // Predicated region
      $region13: #{tpu_custom_call.1} parent=5 // pred_check
        %p123 = pneg %p122
      $region14: #{tpu_custom_call.1} parent=5 // pred_check_branch
        %125 = sbr.rel (%p123) target = $region16
      $region15: #{tpu_custom_call.1} parent=5 // pred_region
        // Predicated region
        $region17: #{tpu_custom_call.1} parent=15 // pred_check
          %p126 = pneg %p45
        $region18: #{tpu_custom_call.1} parent=15 // pred_check_branch
          %128 = sbr.rel (%p126) target = $region20
        $region19: #{tpu_custom_call.1} parent=15 // pred_region
          %p129 = scmp.lt.s32.totalorder %s18, 1
          %s130 = scalar_select %p129, %s18, 1
          %p131 = scmp.lt.s32.totalorder %s19, 0
          %s132 = scalar_select %p131, %s19, 0
          %s133 = smul.addr %s130, 4
          %s134 = sadd.s32 %s132, %s133
          %s135 = smul.addr %s134, 8
          %s136 = scalar_lea.vmem %s0, %s135
        $region20: #{tpu_custom_call.1} parent=15 // pred_fallthru
          _
        // Predicated region
        $region21: #{tpu_custom_call.1} parent=15 // pred_check
          %p137 = pneg %p73
        $region22: #{tpu_custom_call.1} parent=15 // pred_check_branch
          %139 = sbr.rel (%p137) target = $region24
        $region23: #{tpu_custom_call.1} parent=15 // pred_region
          %p140 = scmp.lt.s32.totalorder %s18, 1
          %s141 = scalar_select %p140, %s18, 1
          %p142 = scmp.lt.s32.totalorder %s19, 0
          %s143 = scalar_select %p142, %s19, 0
          %s144 = sadd.s32 %s143, %s141
          %s145 = scalar_lea.vmem %s1, %s144
        $region24: #{tpu_custom_call.1} parent=15 // pred_fallthru
          _
      $region16: #{tpu_custom_call.1} parent=5 // pred_fallthru
        _
      %p146 = scmp.le.s32.totalorder 1, %s11
      %p147 = scmp.lt.s32.totalorder %s11, 3
      %p148 = pnand %p146, %p147
      %p149 = pneg %p148
      // Predicated region
      $region25: #{tpu_custom_call.1} parent=5 // pred_check
        _
      $region26: #{tpu_custom_call.1} parent=5 // pred_check_branch
        %151 = sbr.rel (%p148) target = $region28
      $region27: #{tpu_custom_call.1} parent=5 // pred_region
        %s152 = ssub.s32 %s11, 1
        %p153 = scmp.lt.s32.totalorder %s20, 1
        %s154 = scalar_select %p153, %s20, 1
        %p155 = scmp.lt.s32.totalorder %s21, 0
        %s156 = scalar_select %p155, %s21, 0
        %s157 = smul.addr %s154, 4
        %s158 = sadd.s32 %s156, %s157
        %s159 = smul.addr %s158, 8
        %s160 = scalar_lea.vmem %s0, %s159
        %p161 = pneg %p51
        %p162 = pneg %p48
        %p163 = scmp.lt.s32.totalorder %s20, 1
        %s164 = scalar_select %p163, %s20, 1
        %p165 = scmp.lt.s32.totalorder %s21, 0
        %s166 = scalar_select %p165, %s21, 0
        %s167 = sadd.s32 %s166, %s164
        %s168 = scalar_lea.vmem %s1, %s167
        %p169 = pneg %p79
        %p170 = pneg %p76
        %p171 = pneg %p107
        %p172 = pneg %p104
        %s173 = sand.u32 %s94, 1
        %s174 = scalar_lea.sflag [#allocation3], %s173
        %s175 = sand.u32 %s94, 1
        %s176 = scalar_lea.vmem [#allocation2], %s175
        %p177 = scmp.lt.s32.totalorder %s20, 1
        %s178 = scalar_select %p177, %s20, 1
        %p179 = scmp.lt.s32.totalorder %s21, 0
        %s180 = scalar_select %p179, %s21, 0
        %s181 = smul.addr %s178, 4
        %s182 = sadd.s32 %s180, %s181
        %s183 = smul.addr %s182, 8
        %s184 = scalar_lea.vmem %s0, %s183
        %p185 = scmp.lt.s32.totalorder %s20, 1
        %s186 = scalar_select %p185, %s20, 1
        %p187 = scmp.lt.s32.totalorder %s21, 0
        %s188 = scalar_select %p187, %s21, 0
        %s189 = sadd.s32 %s188, %s186
        %s190 = scalar_lea.vmem %s1, %s189
        %v191 = vld [vmem:[%s184] sm:$0xff]
        %v192 = vld [vmem:[%s184 + $0x8] sm:$0xff]
        %v193 = vld [vmem:[%s184 + $0x10] sm:$0xff]
        %v194 = vld [vmem:[%s184 + $0x18] sm:$0xff]
        %v195 = vld [vmem:[%s190] sm:$0x1]
        %vm196 = vcmask 64512
        %v197 = vsel %vm196, %v191, -inf
        %v198 = vsel %vm196, %v192, -inf
        %v199 = vsel %vm196, %v193, -inf
        %v200 = vsel %vm196, %v194, -inf
        %v201 = vmax.f32 %v197, %v198
        %v202 = vmax.f32 %v199, %v200
        %v203 = vmax.f32 %v201, %v202
        %v204 = vrot.slane %v203, 4
        %v205 = vmax.f32 %v203, %v204
        %v206 = vrot.slane %v205, 2
        %v207 = vmax.f32 %v205, %v206
        %v208 = vrot.slane %v207, 1
        %v209 = vmax.f32 %v207, %v208
        %v210 = vsub.f32 %v191, %v209
        %v211 = vsub.f32 %v192, %v209
        %v212 = vsub.f32 %v193, %v209
        %v213 = vsub.f32 %v194, %v209
        %v214 = vmul.f32 %v210, 1.442695
        %v215 = vpow.pop %v214
        %v216 = vmul.f32 %v211, 1.442695
        %v217 = vpow.pop %v216
        %v218 = vmul.f32 %v212, 1.442695
        %v219 = vpow.pop %v218
        %v220 = vmul.f32 %v213, 1.442695
        %v221 = vpow.pop %v220
        %v222 = vsel %vm196, %v215, 0.0
        %v223 = vsel %vm196, %v217, 0.0
        %v224 = vadd.f32 %v222, %v223
        %v225 = vsel %vm196, %v219, 0.0
        %v226 = vadd.f32 %v224, %v225
        %v227 = vsel %vm196, %v221, 0.0
        %v228 = vadd.f32 %v226, %v227
        %v229 = vrot.slane %v228, 4
        %v230 = vadd.f32 %v228, %v229
        %v231 = vrot.slane %v230, 2
        %v232 = vadd.f32 %v230, %v231
        %v233 = vrot.slane %v232, 1
        %v234 = vadd.f32 %v232, %v233
        %v235 = vlog2.pop %v234
        %v236 = vmul.f32 %v235, 0.6931472
        %v237 = vadd.f32 %v236, %v209
        %v238 = vsel %vm196, %v191, 0.0
        %v239 = vsel %vm196, %v192, 0.0
        %v240 = vadd.f32 %v238, %v239
        %v241 = vsel %vm196, %v193, 0.0
        %v242 = vadd.f32 %v240, %v241
        %v243 = vsel %vm196, %v194, 0.0
        %v244 = vadd.f32 %v242, %v243
        %v245 = vrot.slane %v244, 4
        %v246 = vadd.f32 %v244, %v245
        %v247 = vrot.slane %v246, 2
        %v248 = vadd.f32 %v246, %v247
        %v249 = vrot.slane %v248, 1
        %v250 = vadd.f32 %v248, %v249
        %v251 = vlaneseq
        %v252 = vshrl.u32 %v251, 7
        %v253 = vadd.s32 %v252, 8
        %v254 = vadd.s32 %v252, 16
        %v255 = vadd.s32 %v252, 24
        %v256 = vlaneseq
        %v257 = vshrl.u32 %v256, 7
        %v258 = vsub.s32 0, %v257
        %v259 = vrot.slane %v195, %v258
        %vm260 = vcmp.eq.s32.totalorder %v252, %v259
        %vm261 = vcmp.eq.s32.totalorder %v253, %v259
        %vm262 = vcmp.eq.s32.totalorder %v254, %v259
        %vm263 = vcmp.eq.s32.totalorder %v255, %v259
        %v264 = vsel %vm260, %v191, 0.0
        %v265 = vsel %vm261, %v192, 0.0
        %v266 = vsel %vm262, %v193, 0.0
        %v267 = vsel %vm263, %v194, 0.0
        %v268 = vsel %vm196, %v264, 0.0
        %v269 = vsel %vm196, %v265, 0.0
        %v270 = vadd.f32 %v268, %v269
        %v271 = vsel %vm196, %v266, 0.0
        %v272 = vadd.f32 %v270, %v271
        %v273 = vsel %vm196, %v267, 0.0
        %v274 = vadd.f32 %v272, %v273
        %v275 = vrot.slane %v274, 4
        %v276 = vadd.f32 %v274, %v275
        %v277 = vrot.slane %v276, 2
        %v278 = vadd.f32 %v276, %v277
        %v279 = vrot.slane %v278, 1
        %v280 = vadd.f32 %v278, %v279
        %v281 = vmul.f32 %v250, 0.003125
        %v282 = vsub.f32 %v237, %v281
        %v283 = vmul.f32 %v280, 0.9
        %v284 = vsub.f32 %v282, %v283
        %v285 = vlaneseq
        %v286 = vand.u32 %v285, 127
        %s287 = smul.u32 %s21, 8
        %v288 = vstv %s287
        %v289 = vadd.s32 %v286, %v288
        %vm290 = vcmp.lt.s32.totalorder %v289, 8
        %v291 = vsel %vm290, %v284, 0.0
        %vm292 = vcmask 57344
        %293 = vst.msk [vmem:[%s176] sm:$0x1] %vm292, %v291
        %s294 = sand.u32 %s94, 1
        %s295 = scalar_lea.sflag [#allocation3], %s294
        %s296 = sand.u32 %s94, 1
        %s297 = scalar_lea.vmem [#allocation2], %s296
        // Predicated region
        $region29: #{tpu_custom_call.1} parent=27 // pred_check
          %p298 = pneg %p104
        $region30: #{tpu_custom_call.1} parent=27 // pred_check_branch
          %300 = sbr.rel (%p298) target = $region32
        $region31: #{tpu_custom_call.1} parent=27 // pred_region
          %s302 = ssub.s32 16, 16
          %303 = vsyncadd %s295, %s302
          %s304 = sadd.s32 %s21, %s20
          %s305 = smul.addr %s304, 16
          %s306 = scalar_lea.hbm %s2, %s305
          %s308 = sshll.u32 %s297, 4
          %s309 = int_to_ptr.vmem [resolvable:$true] %s308
          %311 = dma.vmem_to_hbm [thread:$0]  %s309, 16, %s306, %s295
        $region32: #{tpu_custom_call.1} parent=27 // pred_fallthru
          _
      $region28: #{tpu_custom_call.1} parent=5 // pred_fallthru
        _
      %p312 = scmp.le.s32.totalorder 2, %s11
      // Predicated region
      $region33: #{tpu_custom_call.1} parent=5 // pred_check
        %p313 = pneg %p312
      $region34: #{tpu_custom_call.1} parent=5 // pred_check_branch
        %315 = sbr.rel (%p313) target = $region36
      $region35: #{tpu_custom_call.1} parent=5 // pred_region
        %s316 = ssub.s32 %s11, 2
        // Predicated region
        $region37: #{tpu_custom_call.1} parent=35 // pred_check
          %p317 = pneg %p110
        $region38: #{tpu_custom_call.1} parent=35 // pred_check_branch
          %319 = sbr.rel (%p317) target = $region40
        $region39: #{tpu_custom_call.1} parent=35 // pred_region
          %s320 = sand.u32 %s95, 1
          %s321 = scalar_lea.sflag [#allocation3], %s320
          %s322 = sand.u32 %s95, 1
          %s323 = scalar_lea.vmem [#allocation2], %s322
          %324 = dma.done %s321, 16
        $region40: #{tpu_custom_call.1} parent=35 // pred_fallthru
          _
      $region36: #{tpu_custom_call.1} parent=5 // pred_fallthru
        _
    $region6: #{tpu_custom_call.1} parent=1 // loop_footer
      %s15 = sadd.s32 1, %s11
    $region7: #{tpu_custom_call.1} parent=1 // loop_footer_branch
      %10 = sbr.rel target = $region3
    $region8: #{tpu_custom_call.1} parent=1 // loop_exit
      _
    %325 = vsyncpa [#allocation3], 1
    %s326 = scalar_lea.sflag [#allocation3], 1
    %327 = vsyncpa %s326, 1

</llo_original>
